<compile_context>
chip_gen: v6e
topology: v6e:2x2x1
jax: 0.10.0
libtpu: 0.0.40
codegen_flags: <defaults>
</compile_context>

<pallas_src>
import functools

import jax
import jax.numpy as jnp
from jax.experimental import pallas as pl
from jax.experimental.pallas import tpu as pltpu


def _perp_kernel(tb_ref, rm_ref, lg_ref, out_ref, acc_ref, *,
                 batch_size, total_rows, block_rows):
    i = pl.program_id(0)

    @pl.when(i == 0)
    def _():
        acc_ref[...] = jnp.zeros_like(acc_ref)

    tb = tb_ref[...].astype(jnp.float32)   # (block_rows, D)
    rm = rm_ref[...].astype(jnp.float32)   # (block_rows, D)
    lg = lg_ref[...].astype(jnp.float32)   # (block_rows, D)

    # Masked, shift-stabilized softmax statistics over the decision dim (lanes).
    b = jnp.max(lg, axis=-1, keepdims=True)                 # (R, 1)
    exp_pred = jnp.exp(lg - b) * rm + 1e-30                 # (R, D)
    norm = jnp.sum(exp_pred, axis=-1, keepdims=True)        # (R, 1)
    dot = jnp.sum(tb * exp_pred, axis=-1, keepdims=True)    # (R, 1)

    # prob is never materialized: |sum(tb * exp_pred/norm)| == |dot| / norm, norm >= 1e-30 > 0.
    ll = jnp.abs(dot) / norm                                # (R, 1)
    mask = 1.0 - rm[:, -1:]                                 # (R, 1)
    logll = mask * jnp.log(ll)                              # (R, 1)

    # Zero out padded tail rows so they cannot poison the accumulator.
    row_ids = i * block_rows + jax.lax.broadcasted_iota(jnp.int32, logll.shape, 0)
    logll = jnp.where(row_ids < total_rows, logll, 0.0)

    # Vector accumulator: plain VPU add per step; the cross-lane/sublane reduce
    # and the scalar store happen exactly once, below.
    acc_ref[...] += logll

    @pl.when(i == pl.num_programs(0) - 1)
    def _():
        out_ref[...] = -jnp.sum(acc_ref[...], keepdims=True) / jnp.float32(batch_size)


def perp_loss(true_binary, rule_masks, raw_logits):
    """Pallas implementation of MyPerpLoss.forward (PerpCalculator, loss_type='perplexity')."""
    T, B, D = raw_logits.shape
    rows = T * B

    tb2 = true_binary.reshape(rows, D)
    rm2 = rule_masks.reshape(rows, D)
    lg2 = raw_logits.reshape(rows, D)

    # Pad the row axis to a multiple of 8 sublanes if needed; padded rows are
    # masked out inside the kernel (they contribute 0 to the loss).
    rows_pad = ((rows + 7) // 8) * 8
    if rows_pad != rows:
        pad = rows_pad - rows
        tb2 = jnp.pad(tb2, ((0, pad), (0, 0)))
        rm2 = jnp.pad(rm2, ((0, pad), (0, 0)))
        lg2 = jnp.pad(lg2, ((0, pad), (0, 0)))

    # Row-block sizing: ~4 MiB of payload per input block (amortizes per-step
    # overhead, >85% of HBM roofline territory), capped so that
    # 3 inputs x 2 pipeline buffers + the (block_rows, 1) accumulator stay well
    # inside the 64 MiB VMEM of a v7x TensorCore.
    target_block_bytes = 4 * 1024 * 1024
    bytes_per_row = D * 4
    block_rows = max(8, (target_block_bytes // bytes_per_row) // 8 * 8)
    block_rows = min(block_rows, 8192, rows_pad)

    grid = (pl.cdiv(rows_pad, block_rows),)

    kernel = functools.partial(
        _perp_kernel, batch_size=B, total_rows=rows, block_rows=block_rows)

    out = pl.pallas_call(
        kernel,
        out_shape=jax.ShapeDtypeStruct((1, 1), jnp.float32),
        grid_spec=pltpu.PrefetchScalarGridSpec(
            num_scalar_prefetch=0,
            grid=grid,
            in_specs=[
                pl.BlockSpec((block_rows, D), lambda i: (i, 0)),  # true_binary
                pl.BlockSpec((block_rows, D), lambda i: (i, 0)),  # rule_masks
                pl.BlockSpec((block_rows, D), lambda i: (i, 0)),  # raw_logits
            ],
            out_specs=pl.BlockSpec((1, 1), lambda i: (0, 0)),
            scratch_shapes=[pltpu.VMEM((block_rows, 1), jnp.float32)],
        ),
        compiler_params=pltpu.CompilerParams(
            dimension_semantics=("arbitrary",),   # row axis carries the accumulator
            vmem_limit_bytes=48 * 1024 * 1024,
        ),
    )(tb2, rm2, lg2)
    return out[0, 0]


def perp_loss_ref(true_binary, rule_masks, raw_logits):
    """Pure-JAX reference mirroring the PyTorch forward exactly."""
    tb = true_binary.astype(jnp.float32)
    rm = rule_masks.astype(jnp.float32)
    lg = raw_logits.astype(jnp.float32)
    b = jnp.max(lg, axis=2, keepdims=True)
    exp_pred = jnp.exp(lg - b) * rm + 1e-30
    norm = jnp.sum(exp_pred, axis=2, keepdims=True)
    prob = exp_pred / norm
    ll = jnp.abs(jnp.sum(tb * prob, axis=2))
    mask = 1.0 - rm[:, :, -1]
    logll = mask * jnp.log(ll)
    return -jnp.sum(logll) / tb.shape[1]


if __name__ == "__main__":
    # Small shapes consistent with the module docstring (seq_len x batch x decision_dim).
    T, B, D = 8, 4, 80

    key = jax.random.PRNGKey(0)
    k_idx, k_mask, k_logit = jax.random.split(key, 3)

    # one-hot targets
    idx = jax.random.randint(k_idx, (T, B), 0, D)
    true_binary = jax.nn.one_hot(idx, D, dtype=jnp.float32)

    # binary rule masks; force the true decision to be allowed so log(ll) is finite
    rule_masks = (jax.random.uniform(k_mask, (T, B, D)) < 0.5).astype(jnp.float32)
    rule_masks = jnp.maximum(rule_masks, true_binary)

    raw_logits = jax.random.normal(k_logit, (T, B, D), dtype=jnp.float32)

    loss = perp_loss(true_binary, rule_masks, raw_logits)
    loss = jax.block_until_ready(loss)

    ref = perp_loss_ref(true_binary, rule_masks, raw_logits)
    assert jnp.allclose(loss, ref, rtol=1e-5, atol=1e-5), (loss, ref)

    print("KERNEL_OK")
</pallas_src>

<mosaic_0001>
module attributes {stable_mosaic.version = 11 : i64} {
  func.func @_perp_kernel(%arg0: i32, %arg1: memref<32x80xf32, #tpu.memory_space<vmem>>, %arg2: memref<32x80xf32, #tpu.memory_space<vmem>>, %arg3: memref<32x80xf32, #tpu.memory_space<vmem>>, %arg4: memref<1x1xf32, #tpu.memory_space<vmem>>, %arg5: memref<32x1xf32, #tpu.memory_space<vmem>>) attributes {dimension_semantics = [#tpu.dimension_semantics<arbitrary>], iteration_bounds = array<i64: 1>, scalar_prefetch = 0 : i64, scratch_operands = 1 : i64, tpu.core_type = #tpu.core_type<tc>, window_params = [{transform_indices = @transform_0, window_bounds = array<i64: 32, 80>}, {transform_indices = @transform_1, window_bounds = array<i64: 32, 80>}, {transform_indices = @transform_2, window_bounds = array<i64: 32, 80>}, {pipeline_mode = #tpu.pipeline_mode<synchronous>, transform_indices = @transform_3, window_bounds = array<i64: 1, 1>}]} {
    %c0_i32 = arith.constant 0 : i32
    %0 = arith.cmpi eq, %arg0, %c0_i32 : i32
    %1 = arith.extui %0 : i1 to i32
    %c0_i32_0 = arith.constant 0 : i32
    %2 = arith.cmpi ne, %1, %c0_i32_0 : i32
    scf.if %2 {
      %cst_18 = arith.constant 0.000000e+00 : f32
      %40 = vector.broadcast %cst_18 : f32 to vector<32x1xf32>
      %c0_19 = arith.constant 0 : index
      %c0_20 = arith.constant 0 : index
      %41 = vector.load %arg5[%c0_19, %c0_20] : memref<32x1xf32, #tpu.memory_space<vmem>>, vector<32x1xf32>
      tpu.vector_store %arg5[%c0_19, %c0_20], %40 {strides = array<i32>} : memref<32x1xf32, #tpu.memory_space<vmem>>, vector<32x1xf32>,
    } else {
    }
    %c0 = arith.constant 0 : index
    %c0_1 = arith.constant 0 : index
    %3 = vector.load %arg1[%c0, %c0_1] : memref<32x80xf32, #tpu.memory_space<vmem>>, vector<32x80xf32>
    %c0_2 = arith.constant 0 : index
    %c0_3 = arith.constant 0 : index
    %4 = vector.load %arg2[%c0_2, %c0_3] : memref<32x80xf32, #tpu.memory_space<vmem>>, vector<32x80xf32>
    %c0_4 = arith.constant 0 : index
    %c0_5 = arith.constant 0 : index
    %5 = vector.load %arg3[%c0_4, %c0_5] : memref<32x80xf32, #tpu.memory_space<vmem>>, vector<32x80xf32>
    %cst = arith.constant dense<0xFF800000> : vector<32xf32>
    %6 = vector.multi_reduction <maximumf>, %5, %cst [1] : vector<32x80xf32> to vector<32xf32>
    %7 = vector.shape_cast %6 : vector<32xf32> to vector<32x1xf32>
    %8 = vector.broadcast %7 : vector<32x1xf32> to vector<32x80xf32>
    %9 = arith.subf %5, %8 : vector<32x80xf32>
    %10 = math.exp %9 : vector<32x80xf32>
    %11 = arith.mulf %10, %4 : vector<32x80xf32>
    %cst_6 = arith.constant 1.000000e-30 : f32
    %12 = vector.broadcast %cst_6 : f32 to vector<32x80xf32>
    %13 = arith.addf %11, %12 : vector<32x80xf32>
    %cst_7 = arith.constant dense<0.000000e+00> : vector<32xf32>
    %14 = vector.multi_reduction <add>, %13, %cst_7 [1] : vector<32x80xf32> to vector<32xf32>
    %15 = vector.shape_cast %14 : vector<32xf32> to vector<32x1xf32>
    %16 = arith.mulf %3, %13 : vector<32x80xf32>
    %cst_8 = arith.constant dense<0.000000e+00> : vector<32xf32>
    %17 = vector.multi_reduction <add>, %16, %cst_8 [1] : vector<32x80xf32> to vector<32xf32>
    %18 = vector.shape_cast %17 : vector<32xf32> to vector<32x1xf32>
    %19 = math.absf %18 : vector<32x1xf32>
    %20 = arith.divf %19, %15 : vector<32x1xf32>
    %21 = vector.extract_strided_slice %4 {offsets = [0, 79], sizes = [32, 1], strides = [1, 1]} : vector<32x80xf32> to vector<32x1xf32>
    %cst_9 = arith.constant 1.000000e+00 : f32
    %22 = vector.broadcast %cst_9 : f32 to vector<32x1xf32>
    %23 = arith.subf %22, %21 : vector<32x1xf32>
    %24 = math.log %20 : vector<32x1xf32>
    %25 = arith.mulf %23, %24 : vector<32x1xf32>
    %c32_i32 = arith.constant 32 : i32
    %26 = arith.muli %arg0, %c32_i32 : i32
    %27 = tpu.iota {dimensions = array<i32: 0>} : vector<32x1xi32>
    %28 = vector.broadcast %26 : i32 to vector<32x1xi32>
    %29 = arith.addi %28, %27 : vector<32x1xi32>
    %c32_i32_10 = arith.constant 32 : i32
    %30 = vector.broadcast %c32_i32_10 : i32 to vector<32x1xi32>
    %31 = arith.cmpi slt, %29, %30 : vector<32x1xi32>
    %cst_11 = arith.constant 0.000000e+00 : f32
    %32 = vector.broadcast %cst_11 : f32 to vector<32x1xf32>
    %33 = arith.select %31, %25, %32 : vector<32x1xi1>, vector<32x1xf32>
    %c0_12 = arith.constant 0 : index
    %c0_13 = arith.constant 0 : index
    %34 = vector.load %arg5[%c0_12, %c0_13] : memref<32x1xf32, #tpu.memory_space<vmem>>, vector<32x1xf32>
    %35 = arith.addf %34, %33 : vector<32x1xf32>
    %c0_14 = arith.constant 0 : index
    %c0_15 = arith.constant 0 : index
    %36 = vector.load %arg5[%c0_14, %c0_15] : memref<32x1xf32, #tpu.memory_space<vmem>>, vector<32x1xf32>
    tpu.vector_store %arg5[%c0_14, %c0_15], %35 {strides = array<i32>} : memref<32x1xf32, #tpu.memory_space<vmem>>, vector<32x1xf32>,
    %c0_i32_16 = arith.constant 0 : i32
    %37 = arith.cmpi eq, %arg0, %c0_i32_16 : i32
    %38 = arith.extui %37 : i1 to i32
    %c0_i32_17 = arith.constant 0 : i32
    %39 = arith.cmpi ne, %38, %c0_i32_17 : i32
    scf.if %39 {
      %c0_18 = arith.constant 0 : index
      %c0_19 = arith.constant 0 : index
      %40 = vector.load %arg5[%c0_18, %c0_19] : memref<32x1xf32, #tpu.memory_space<vmem>>, vector<32x1xf32>
      %41 = vector.shape_cast %40 : vector<32x1xf32> to vector<1x32x1xf32>
      %cst_20 = arith.constant dense<0.000000e+00> : vector<1xf32>
      %42 = vector.multi_reduction <add>, %41, %cst_20 [1, 2] : vector<1x32x1xf32> to vector<1xf32>
      %43 = vector.shape_cast %42 : vector<1xf32> to vector<1x1x1xf32>
      %44 = vector.extract %43[0, 0, 0] : f32 from vector<1x1x1xf32>
      %45 = vector.broadcast %44 : f32 to vector<1x1xf32>
      %cst_21 = arith.constant 0.000000e+00 : f32
      %46 = vector.broadcast %cst_21 : f32 to vector<1x1xf32>
      %47 = arith.subf %46, %45 : vector<1x1xf32>
      %cst_22 = arith.constant 4.000000e+00 : f32
      %48 = vector.broadcast %cst_22 : f32 to vector<1x1xf32>
      %49 = arith.divf %47, %48 : vector<1x1xf32>
      %c0_23 = arith.constant 0 : index
      %c0_24 = arith.constant 0 : index
      %50 = vector.load %arg4[%c0_23, %c0_24] : memref<1x1xf32, #tpu.memory_space<vmem>>, vector<1x1xf32>
      tpu.vector_store %arg4[%c0_23, %c0_24], %49 {strides = array<i32>} : memref<1x1xf32, #tpu.memory_space<vmem>>, vector<1x1xf32>,
    } else {
    }
    return
  }
  func.func @transform_0(%arg0: i32) -> (i32, i32) {
    %c0_i32 = arith.constant 0 : i32
    %c0_i32_0 = arith.constant 0 : i32
    return %arg0, %c0_i32 : i32, i32
  }
  func.func @transform_1(%arg0: i32) -> (i32, i32) {
    %c0_i32 = arith.constant 0 : i32
    %c0_i32_0 = arith.constant 0 : i32
    return %arg0, %c0_i32 : i32, i32
  }
  func.func @transform_2(%arg0: i32) -> (i32, i32) {
    %c0_i32 = arith.constant 0 : i32
    %c0_i32_0 = arith.constant 0 : i32
    return %arg0, %c0_i32 : i32, i32
  }
  func.func @transform_3(%arg0: i32) -> (i32, i32) {
    %c0_i32 = arith.constant 0 : i32
    %c0_i32_0 = arith.constant 0 : i32
    %c0_i32_1 = arith.constant 0 : i32
    return %c0_i32, %c0_i32_0 : i32, i32
  }
}

</mosaic_0001>

<llo_original>
// kernel: tpu_custom_call.1
$region0: #{tpu_custom_call.1}
  #allocation0 [shape = 'u32[]', space=smem, size = 0x4, offset = 0x4, fixed_abs, tag = 'smem constant byte address 0x4 - core index']
  #allocation1 [shape = 'u32[144,128]{1,0:T(1,128)}', space=vmem, size = 0x12000, scoped, tag = 'internal scratch']
  #allocation2 [shape = 'f32[32,1]{1,0:T(8,128)}', space=vmem, size = 0x4000, scoped, tag = 'scratch operand']
  %s0 = inlined_call_operand.hbm [shape: f32[32,80], index: 0, kind: input, shape index: {}]
  %s1 = inlined_call_operand.hbm [shape: f32[32,80], index: 1, kind: input, shape index: {}]
  %s2 = inlined_call_operand.hbm [shape: f32[32,80], index: 2, kind: input, shape index: {}]
  %s3 = inlined_call_operand.hbm [shape: f32[1,1], index: 3, kind: output, shape index: {}]
  %s4 = sld [smem:[#allocation0]]
  $region42: #{tpu_custom_call.1} parent=0
    _
  %s6 = ssub.s32 1, %s4
  %s7 = scalar_select 0, %s6, %s4
  $region1: #{tpu_custom_call.1} parent=0
    #allocation3 [shape = 'u8[16384]{0}', space=vmem, size = 0x4000, scoped, tag = 'input window, operand 0, single buffered']
    #allocation4 [shape = 's32[1]{0}', space=sflag, size = 0x4, scoped, tag = 'scoped memory for tpu_custom_call.1']
    #allocation5 [shape = 's32[1]{0}', space=sflag, size = 0x4, scoped, tag = 'scoped memory for tpu_custom_call.1']
    #allocation6 [shape = 'u8[16384]{0}', space=vmem, size = 0x4000, scoped, tag = 'input window, operand 1, single buffered']
    #allocation7 [shape = 's32[1]{0}', space=sflag, size = 0x4, scoped, tag = 'scoped memory for tpu_custom_call.1']
    #allocation8 [shape = 'u8[16384]{0}', space=vmem, size = 0x4000, scoped, tag = 'input window, operand 2, single buffered']
    #allocation9 [shape = 'u8[512]{0}', space=vmem, size = 0x400, scoped, tag = 'output window, operand 0, single buffered']
    %8 = vsyncpa [#allocation4], 0
    %9 = vsyncpa [#allocation7], 0
    %10 = vsyncpa [#allocation5], 0
    // Predicated region
    $region2: #{tpu_custom_call.1} parent=1 // pred_check
      _
    $region3: #{tpu_custom_call.1} parent=1 // pred_check_branch
      %12 = sbr.rel (0) target = $region5
    $region4: #{tpu_custom_call.1} parent=1 // pred_region
      %s14 = ssub.s32 512, 512
      %15 = vsyncadd [#allocation4], %s14
      %s16 = sshll.u32 [#allocation3], 4
      %s17 = int_to_ptr.vmem [resolvable:$true] %s16
      %22 = dma.hbm_to_vmem [thread:$0]  %s0, 512, %s17, [#allocation4], 128, 128, 8
    $region5: #{tpu_custom_call.1} parent=1 // pred_fallthru
      _
    // Predicated region
    $region6: #{tpu_custom_call.1} parent=1 // pred_check
      _
    $region7: #{tpu_custom_call.1} parent=1 // pred_check_branch
      %24 = sbr.rel (0) target = $region9
    $region8: #{tpu_custom_call.1} parent=1 // pred_region
      %s26 = ssub.s32 512, 512
      %27 = vsyncadd [#allocation7], %s26
      %s28 = sshll.u32 [#allocation6], 4
      %s29 = int_to_ptr.vmem [resolvable:$true] %s28
      %34 = dma.hbm_to_vmem [thread:$0]  %s1, 512, %s29, [#allocation7], 128, 128, 8
    $region9: #{tpu_custom_call.1} parent=1 // pred_fallthru
      _
    // Predicated region
    $region10: #{tpu_custom_call.1} parent=1 // pred_check
      _
    $region11: #{tpu_custom_call.1} parent=1 // pred_check_branch
      %36 = sbr.rel (0) target = $region13
    $region12: #{tpu_custom_call.1} parent=1 // pred_region
      %s38 = ssub.s32 512, 512
      %39 = vsyncadd [#allocation7], %s38
      %s40 = sshll.u32 [#allocation8], 4
      %s41 = int_to_ptr.vmem [resolvable:$true] %s40
      %46 = dma.hbm_to_vmem [thread:$0]  %s2, 512, %s41, [#allocation7], 128, 128, 8
    $region13: #{tpu_custom_call.1} parent=1 // pred_fallthru
      _
    // Predicated region
    $region14: #{tpu_custom_call.1} parent=1 // pred_check
      _
    $region15: #{tpu_custom_call.1} parent=1 // pred_check_branch
      %48 = sbr.rel (0) target = $region17
    $region16: #{tpu_custom_call.1} parent=1 // pred_region
      %49 = dma.done [#allocation4], 512
    $region17: #{tpu_custom_call.1} parent=1 // pred_fallthru
      _
    // Predicated region
    $region18: #{tpu_custom_call.1} parent=1 // pred_check
      _
    $region19: #{tpu_custom_call.1} parent=1 // pred_check_branch
      %51 = sbr.rel (0) target = $region21
    $region20: #{tpu_custom_call.1} parent=1 // pred_region
      %52 = dma.done [#allocation7], 512
    $region21: #{tpu_custom_call.1} parent=1 // pred_fallthru
      _
    // Predicated region
    $region22: #{tpu_custom_call.1} parent=1 // pred_check
      _
    $region23: #{tpu_custom_call.1} parent=1 // pred_check_branch
      %54 = sbr.rel (0) target = $region25
    $region24: #{tpu_custom_call.1} parent=1 // pred_region
      %55 = dma.done [#allocation7], 512
    $region25: #{tpu_custom_call.1} parent=1 // pred_fallthru
      _
    %p56 = scmp.eq.s32.totalorder 0, 0
    // Predicated region
    $region26: #{tpu_custom_call.1} parent=1 // pred_check
      %p57 = pneg %p56
    $region27: #{tpu_custom_call.1} parent=1 // pred_check_branch
      %59 = sbr.rel (%p57) target = $region29
    $region28: #{tpu_custom_call.1} parent=1 // pred_region
      %vm60 = vcmask 7168
      %61 = vst.msk [vmem:[#allocation2] sm:$0xff] %vm60, 0.0
      %62 = vst.msk [vmem:[#allocation2 + $0x8] sm:$0xff] %vm60, 0.0
      %63 = vst.msk [vmem:[#allocation2 + $0x10] sm:$0xff] %vm60, 0.0
      %64 = vst.msk [vmem:[#allocation2 + $0x18] sm:$0xff] %vm60, 0.0
    $region29: #{tpu_custom_call.1} parent=1 // pred_fallthru
      _
    %v65 = vld [vmem:[#allocation3] sm:$0xff]
    %v66 = vld [vmem:[#allocation3 + $0x8] sm:$0xff]
    %v67 = vld [vmem:[#allocation3 + $0x10] sm:$0xff]
    %v68 = vld [vmem:[#allocation3 + $0x18] sm:$0xff]
    %v69 = vld [vmem:[#allocation6] sm:$0xff]
    %v70 = vld [vmem:[#allocation6 + $0x8] sm:$0xff]
    %v71 = vld [vmem:[#allocation6 + $0x10] sm:$0xff]
    %v72 = vld [vmem:[#allocation6 + $0x18] sm:$0xff]
    %v73 = vld [vmem:[#allocation8] sm:$0xff]
    %v74 = vld [vmem:[#allocation8 + $0x8] sm:$0xff]
    %v75 = vld [vmem:[#allocation8 + $0x10] sm:$0xff]
    %v76 = vld [vmem:[#allocation8 + $0x18] sm:$0xff]
    %vm77 = vcmask 654336
    %v78 = vsel %vm77, %v73, -inf
    %79 = vmax.xlane.f32.xlu0 %v78
    %v80 = vpop.xlane.xlu0 %79
    %v81 = vsel %vm77, %v74, -inf
    %82 = vmax.xlane.f32.xlu0 %v81
    %v83 = vpop.xlane.xlu0 %82
    %v84 = vsel %vm77, %v75, -inf
    %85 = vmax.xlane.f32.xlu0 %v84
    %v86 = vpop.xlane.xlu0 %85
    %v87 = vsel %vm77, %v76, -inf
    %88 = vmax.xlane.f32.xlu0 %v87
    %v89 = vpop.xlane.xlu0 %88
    %v90 = vsub.f32 %v73, %v80
    %v91 = vsub.f32 %v74, %v83
    %v92 = vsub.f32 %v75, %v86
    %v93 = vsub.f32 %v76, %v89
    %v94 = vmul.f32 %v90, 1.442695
    %v95 = vpow.pop %v94
    %v96 = vmul.f32 %v91, 1.442695
    %v97 = vpow.pop %v96
    %v98 = vmul.f32 %v92, 1.442695
    %v99 = vpow.pop %v98
    %v100 = vmul.f32 %v93, 1.442695
    %v101 = vpow.pop %v100
    %v102 = vmul.f32 %v95, %v69
    %v103 = vmul.f32 %v97, %v70
    %v104 = vmul.f32 %v99, %v71
    %v105 = vmul.f32 %v101, %v72
    %v106 = vadd.f32 %v102, 1e-30
    %v107 = vadd.f32 %v103, 1e-30
    %v108 = vadd.f32 %v104, 1e-30
    %v109 = vadd.f32 %v105, 1e-30
    %v110 = vsel %vm77, %v106, 0.0
    %111 = vadd.xlane.f32.xlu0 %v110
    %v112 = vpop.xlane.xlu0 %111
    %v113 = vsel %vm77, %v107, 0.0
    %114 = vadd.xlane.f32.xlu0 %v113
    %v115 = vpop.xlane.xlu0 %114
    %v116 = vsel %vm77, %v108, 0.0
    %117 = vadd.xlane.f32.xlu0 %v116
    %v118 = vpop.xlane.xlu0 %117
    %v119 = vsel %vm77, %v109, 0.0
    %120 = vadd.xlane.f32.xlu0 %v119
    %v121 = vpop.xlane.xlu0 %120
    %v122 = vmul.f32 %v65, %v106
    %v123 = vmul.f32 %v66, %v107
    %v124 = vmul.f32 %v67, %v108
    %v125 = vmul.f32 %v68, %v109
    %v126 = vsel %vm77, %v122, 0.0
    %127 = vadd.xlane.f32.xlu0 %v126
    %v128 = vpop.xlane.xlu0 %127
    %v129 = vsel %vm77, %v123, 0.0
    %130 = vadd.xlane.f32.xlu0 %v129
    %v131 = vpop.xlane.xlu0 %130
    %v132 = vsel %vm77, %v124, 0.0
    %133 = vadd.xlane.f32.xlu0 %v132
    %v134 = vpop.xlane.xlu0 %133
    %v135 = vsel %vm77, %v125, 0.0
    %136 = vadd.xlane.f32.xlu0 %v135
    %v137 = vpop.xlane.xlu0 %136
    %v138 = vand.u32 2147483647, %v128
    %v139 = vand.u32 2147483647, %v131
    %v140 = vand.u32 2147483647, %v134
    %v141 = vand.u32 2147483647, %v137
    %v142 = vrcp.pop %v112
    %v143 = vmul.f32 %v138, %v142
    %v144 = vrcp.pop %v115
    %v145 = vmul.f32 %v139, %v144
    %v146 = vrcp.pop %v118
    %v147 = vmul.f32 %v140, %v146
    %v148 = vrcp.pop %v121
    %v149 = vmul.f32 %v141, %v148
    %v150 = vsub.f32 1.0, %v69
    %v151 = vsub.f32 1.0, %v70
    %v152 = vsub.f32 1.0, %v71
    %v153 = vsub.f32 1.0, %v72
    %v154 = vlog2.pop %v143
    %v155 = vmul.f32 %v154, 0.6931472
    %v156 = vlog2.pop %v145
    %v157 = vmul.f32 %v156, 0.6931472
    %v158 = vlog2.pop %v147
    %v159 = vmul.f32 %v158, 0.6931472
    %v160 = vlog2.pop %v149
    %v161 = vmul.f32 %v160, 0.6931472
    %v162 = vmul.f32 %v150, %v155
    %v163 = vmul.f32 %v151, %v157
    %v164 = vmul.f32 %v152, %v159
    %v165 = vmul.f32 %v153, %v161
    %s166 = smul.u32 0, 32
    %v167 = vlaneseq
    %v168 = vshrl.u32 %v167, 7
    %v169 = vadd.s32 %v168, 8
    %v170 = vadd.s32 %v168, 16
    %v171 = vadd.s32 %v168, 24
    %v172 = vstv %s166
    %v173 = vadd.s32 %v172, %v168
    %v174 = vadd.s32 %v172, %v169
    %v175 = vadd.s32 %v172, %v170
    %v176 = vadd.s32 %v172, %v171
    %vm177 = vcmp.lt.s32.totalorder %v173, 32
    %vm178 = vcmp.lt.s32.totalorder %v174, 32
    %vm179 = vcmp.lt.s32.totalorder %v175, 32
    %vm180 = vcmp.lt.s32.totalorder %v176, 32
    %v181 = vsel %vm177, %v162, 0.0
    %v182 = vsel %vm178, %v163, 0.0
    %v183 = vsel %vm179, %v164, 0.0
    %v184 = vsel %vm180, %v165, 0.0
    %v185 = vld [vmem:[#allocation2] sm:$0xff]
    %v186 = vld [vmem:[#allocation2 + $0x8] sm:$0xff]
    %v187 = vld [vmem:[#allocation2 + $0x10] sm:$0xff]
    %v188 = vld [vmem:[#allocation2 + $0x18] sm:$0xff]
    %193 = vrot.lane.b32.xlu0 %v181, 49
    %v194 = vpop.permute.xlu0 %193
    %195 = vrot.lane.b32.xlu0 %v182, 49
    %v196 = vpop.permute.xlu0 %195
    %197 = vrot.lane.b32.xlu0 %v183, 49
    %v198 = vpop.permute.xlu0 %197
    %199 = vrot.lane.b32.xlu0 %v184, 49
    %v200 = vpop.permute.xlu0 %199
    %v205 = vadd.f32 %v185, %v194
    %v206 = vadd.f32 %v186, %v196
    %v207 = vadd.f32 %v187, %v198
    %v208 = vadd.f32 %v188, %v200
    %vm209 = vcmask 7168
    %210 = vst.msk [vmem:[#allocation2] sm:$0xff] %vm209, %v205
    %211 = vst.msk [vmem:[#allocation2 + $0x8] sm:$0xff] %vm209, %v206
    %212 = vst.msk [vmem:[#allocation2 + $0x10] sm:$0xff] %vm209, %v207
    %213 = vst.msk [vmem:[#allocation2 + $0x18] sm:$0xff] %vm209, %v208
    // Predicated region
    $region30: #{tpu_custom_call.1} parent=1 // pred_check
      %p214 = pneg %p56
    $region31: #{tpu_custom_call.1} parent=1 // pred_check_branch
      %216 = sbr.rel (%p214) target = $region33
    $region32: #{tpu_custom_call.1} parent=1 // pred_region
      %v217 = vld [vmem:[#allocation2] sm:$0xff]
      %v218 = vld [vmem:[#allocation2 + $0x8] sm:$0xff]
      %v219 = vld [vmem:[#allocation2 + $0x10] sm:$0xff]
      %v220 = vld [vmem:[#allocation2 + $0x18] sm:$0xff]
      %v221 = vsel %vm209, %v217, 0.0
      %v222 = vsel %vm209, %v218, 0.0
      %v223 = vadd.f32 %v221, %v222
      %v224 = vsel %vm209, %v219, 0.0
      %v225 = vadd.f32 %v223, %v224
      %v226 = vsel %vm209, %v220, 0.0
      %v227 = vadd.f32 %v225, %v226
      %228 = vadd.xlane.f32.xlu0 %v227
      %v229 = vpop.xlane.xlu0 %228
      %v230 = vrot.slane %v229, 4
      %v231 = vadd.f32 %v229, %v230
      %v232 = vrot.slane %v231, 2
      %v233 = vadd.f32 %v231, %v232
      %v234 = vrot.slane %v233, 1
      %v235 = vadd.f32 %v233, %v234
      %s236 = vtos %v235
      %v237 = vstv %s236
      %v238 = vsub.f32 0.0, %v237
      %v239 = vrcp.pop 4.0
      %v240 = vmul.f32 %v238, %v239
      %vm241 = vcmask 0
      %242 = vst.msk [vmem:[#allocation9] sm:$0x1] %vm241, %v240
    $region33: #{tpu_custom_call.1} parent=1 // pred_fallthru
      _
    // Predicated region
    $region34: #{tpu_custom_call.1} parent=1 // pred_check
      _
    $region35: #{tpu_custom_call.1} parent=1 // pred_check_branch
      %244 = sbr.rel (0) target = $region37
    $region36: #{tpu_custom_call.1} parent=1 // pred_region
      %s246 = ssub.s32 16, 16
      %247 = vsyncadd [#allocation5], %s246
      %s249 = sshll.u32 [#allocation9], 4
      %s250 = int_to_ptr.vmem [resolvable:$true] %s249
      %252 = dma.vmem_to_hbm [thread:$0]  %s250, 16, %s3, [#allocation5]
    $region37: #{tpu_custom_call.1} parent=1 // pred_fallthru
      _
    // Predicated region
    $region38: #{tpu_custom_call.1} parent=1 // pred_check
      _
    $region39: #{tpu_custom_call.1} parent=1 // pred_check_branch
      %254 = sbr.rel (0) target = $region41
    $region40: #{tpu_custom_call.1} parent=1 // pred_region
      %255 = dma.done [#allocation5], 16
    $region41: #{tpu_custom_call.1} parent=1 // pred_fallthru
      _
    %256 = vsyncpa [#allocation4], 1
    %257 = vsyncpa [#allocation7], 1
    %258 = vsyncpa [#allocation5], 1

</llo_original>
